<compile_context>
chip_gen: v7x
topology: tpu7x:2x2x1
jax: 0.10.0
libtpu: 0.0.40
codegen_flags: <defaults>
</compile_context>

<pallas_src>
import math
import numpy as np
import jax
import jax.numpy as jnp
from jax.experimental import pallas as pl
from jax.experimental.pallas import tpu as pltpu

N = 32
GAMMA = 0.01
_LANES = 128


# ---------------------------------------------------------------------------
# Kernel 1: M = A + P (lane-dense) and ||P||_F  ->  SMEM scalar
# ---------------------------------------------------------------------------
def add_frob_kernel(a_ref, pre_ref, pim_ref, m_ref, pnorm_ref):
    a = a_ref[...]          # (rows, 128) reshape of A          (A is real)
    pre = pre_ref[...]      # (rows, 128) reshape of Re(P)
    pim = pim_ref[...]      # (rows, 128) reshape of Im(P)
    # Single unmasked (2*rows, 128) store: [Re(A+P) ; Im(A+P)]
    m_ref[...] = jnp.concatenate([a + pre, pim], axis=0)
    # Frobenius norm of P, sqrt on the EUP, scalar straight to SMEM.
    pnorm_ref[0, 0] = jnp.sqrt(jnp.sum(pre * pre + pim * pim))


def add_and_frob(a, p_re, p_im):
    n = a.shape[0]
    assert (n * n) % _LANES == 0
    rows = (n * n) // _LANES
    vmem = pl.BlockSpec(memory_space=pltpu.MemorySpace.VMEM)
    smem = pl.BlockSpec(memory_space=pltpu.MemorySpace.SMEM)
    m_slab, pnorm = pl.pallas_call(
        add_frob_kernel,
        in_specs=[vmem, vmem, vmem],
        out_specs=(vmem, smem),
        out_shape=(
            jax.ShapeDtypeStruct((2 * rows, _LANES), jnp.float32),
            jax.ShapeDtypeStruct((1, 1), jnp.float32),
        ),
    )(a.reshape(rows, _LANES),
      p_re.reshape(rows, _LANES),
      p_im.reshape(rows, _LANES))
    m_re = m_slab[:rows].reshape(n, n)
    m_im = m_slab[rows:].reshape(n, n)
    return m_re, m_im, pnorm[0, 0]


# ---------------------------------------------------------------------------
# Host callback: general complex eig + SVD-based condition number.
# ---------------------------------------------------------------------------
def _host_eig_cond(m_re, m_im):
    # TODO(synk): general (non-Hermitian) complex eig and SVD-based cond have
    # no Pallas/TPU lowering; evaluated on host (same as torch.linalg.eig /
    # torch.linalg.cond) via pure_callback.  cond is taken directly from the
    # singular values of V (NOT from V^H V) so no precision is lost in f32.
    m = (np.asarray(m_re) + 1j * np.asarray(m_im)).astype(np.complex64)
    _, v = np.linalg.eig(m)
    return np.float32(np.linalg.cond(v))


# ---------------------------------------------------------------------------
# forward()
# ---------------------------------------------------------------------------
@jax.jit
def perturbation_forward(a, p_re, p_im):
    # Pallas: M = A + P, ||P||_F
    m_re, m_im, p_norm = add_and_frob(a, p_re, p_im)

    # Host: eig(M) -> V, cond_2(V) (single callback, single scalar back).
    cond = jax.pure_callback(
        _host_eig_cond, jax.ShapeDtypeStruct((), jnp.float32), m_re, m_im)

    return cond, p_norm


# ---------------------------------------------------------------------------
# Parameter / constant construction (mirrors nn.Module.__init__)
# ---------------------------------------------------------------------------
def make_A(n):
    A = np.zeros([n, n], dtype=np.float32)
    for i in range(n):
        for j in range(i):
            A[i, j] = math.sqrt(2 * i + 1) * math.sqrt(2 * j + 1)
        A[i, i] = i + 1
    return A  # real-valued (stored as cfloat in torch, imag part is 0)


def make_P(key, n, gamma):
    k_re, k_im = jax.random.split(key)
    # torch.rand(complex64): real & imag each Uniform[0, 1), then * gamma * 0.5
    p_re = jax.random.uniform(k_re, (n, n), dtype=jnp.float32) * (gamma * 0.5)
    p_im = jax.random.uniform(k_im, (n, n), dtype=jnp.float32) * (gamma * 0.5)
    return p_re, p_im


if __name__ == "__main__":
    key = jax.random.PRNGKey(0)
    A = jnp.asarray(make_A(N))
    p_re, p_im = make_P(key, N, GAMMA)

    cond, p_norm = perturbation_forward(A, p_re, p_im)
    cond = jax.block_until_ready(cond)
    p_norm = jax.block_until_ready(p_norm)

    # sanity checks against numpy reference (same complex64 path as torch)
    p_np = np.asarray(p_re) + 1j * np.asarray(p_im)
    ref_norm = np.linalg.norm(p_np)
    assert np.allclose(float(p_norm), ref_norm, rtol=1e-5, atol=1e-6), (p_norm, ref_norm)

    M_np = make_A(N).astype(np.complex64) + p_np.astype(np.complex64)
    _, V_np = np.linalg.eig(M_np)
    ref_cond = np.linalg.cond(V_np)
    assert np.allclose(float(cond), ref_cond, rtol=5e-2), (cond, ref_cond)

    print("KERNEL_OK")
</pallas_src>

<mosaic_0001>
module attributes {stable_mosaic.version = 11 : i64} {
  func.func @add_frob_kernel(%arg0: memref<8x128xf32, #tpu.memory_space<vmem>>, %arg1: memref<8x128xf32, #tpu.memory_space<vmem>>, %arg2: memref<8x128xf32, #tpu.memory_space<vmem>>, %arg3: memref<16x128xf32, #tpu.memory_space<vmem>>, %arg4: memref<1x1xf32, #tpu.memory_space<smem>>) attributes {dimension_semantics = [], scalar_prefetch = 0 : i64, scratch_operands = 0 : i64, tpu.core_type = #tpu.core_type<tc>} {
    %c0 = arith.constant 0 : index
    %c0_0 = arith.constant 0 : index
    %0 = vector.load %arg0[%c0, %c0_0] : memref<8x128xf32, #tpu.memory_space<vmem>>, vector<8x128xf32>
    %c0_1 = arith.constant 0 : index
    %c0_2 = arith.constant 0 : index
    %1 = vector.load %arg1[%c0_1, %c0_2] : memref<8x128xf32, #tpu.memory_space<vmem>>, vector<8x128xf32>
    %c0_3 = arith.constant 0 : index
    %c0_4 = arith.constant 0 : index
    %2 = vector.load %arg2[%c0_3, %c0_4] : memref<8x128xf32, #tpu.memory_space<vmem>>, vector<8x128xf32>
    %3 = arith.addf %0, %1 : vector<8x128xf32>
    %4 = tpu.concatenate %3, %2 in 0 : vector<8x128xf32>, vector<8x128xf32> -> vector<16x128xf32>
    %c0_5 = arith.constant 0 : index
    %c0_6 = arith.constant 0 : index
    %5 = vector.load %arg3[%c0_5, %c0_6] : memref<16x128xf32, #tpu.memory_space<vmem>>, vector<16x128xf32>
    tpu.vector_store %arg3[%c0_5, %c0_6], %4 {strides = array<i32>} : memref<16x128xf32, #tpu.memory_space<vmem>>, vector<16x128xf32>,
    %6 = arith.mulf %1, %1 : vector<8x128xf32>
    %7 = arith.mulf %2, %2 : vector<8x128xf32>
    %8 = arith.addf %6, %7 : vector<8x128xf32>
    %9 = vector.shape_cast %8 : vector<8x128xf32> to vector<1x8x128xf32>
    %cst = arith.constant dense<0.000000e+00> : vector<1xf32>
    %10 = vector.multi_reduction <add>, %9, %cst [1, 2] : vector<1x8x128xf32> to vector<1xf32>
    %11 = vector.shape_cast %10 : vector<1xf32> to vector<1x1x1xf32>
    %12 = vector.extract %11[0, 0, 0] : f32 from vector<1x1x1xf32>
    %13 = math.sqrt %12 : f32
    %c0_7 = arith.constant 0 : index
    %c0_8 = arith.constant 0 : index
    %14 = memref.load %arg4[%c0_7, %c0_8] : memref<1x1xf32, #tpu.memory_space<smem>>
    memref.store %13, %arg4[%c0_7, %c0_8] : memref<1x1xf32, #tpu.memory_space<smem>>
    return
  }
}

</mosaic_0001>

<llo_original>
// kernel: perturbation_forward.1
$region0: #{perturbation_forward.1}
  #allocation0 [shape = 'u32[]', space=smem, size = 0x4, offset = 0x4, fixed_abs, tag = 'smem constant byte address 0x4 - core index']
  #allocation1 [shape = 'u32[144,128]{1,0:T(1,128)}', space=vmem, size = 0x12000, scoped, tag = 'internal scratch']
  %s0 = inlined_call_operand.vmem [shape: f32[8,128], index: 0, kind: input, shape index: {}]
  %s1 = inlined_call_operand.vmem [shape: f32[8,128], index: 1, kind: input, shape index: {}]
  %s2 = inlined_call_operand.vmem [shape: f32[8,128], index: 2, kind: input, shape index: {}]
  %s3 = inlined_call_operand.vmem [shape: f32[16,128], index: 3, kind: output, shape index: {0}]
  %s4 = inlined_call_operand.hbm [shape: f32[1,1], index: 4, kind: output, shape index: {1}]
  %5 = xla_tuple %s3, %s4
  %s6 = sld [smem:[#allocation0]]
  $region30: #{perturbation_forward.1} parent=0
    _
  %s8 = ssub.s32 1, %s6
  %s9 = scalar_select 0, %s8, %s6
  $region1: #{perturbation_forward.1} parent=0
    #allocation2 [shape = 'u8[512]{0}', space=smem, size = 0x200, scoped, tag = 'output window, operand 1, single buffered']
    #allocation3 [shape = 's32[1]{0}', space=sflag, size = 0x4, scoped, tag = 'scoped memory for perturbation_forward.1']
    %10 = vsyncpa [#allocation3], 0
    // Predicated region
    $region2: #{perturbation_forward.1} parent=1 // pred_check
      _
    $region3: #{perturbation_forward.1} parent=1 // pred_check_branch
      %12 = sbr.rel (0) target = $region5
    $region4: #{perturbation_forward.1} parent=1 // pred_region
      _
    $region5: #{perturbation_forward.1} parent=1 // pred_fallthru
      _
    // Predicated region
    $region6: #{perturbation_forward.1} parent=1 // pred_check
      _
    $region7: #{perturbation_forward.1} parent=1 // pred_check_branch
      %14 = sbr.rel (0) target = $region9
    $region8: #{perturbation_forward.1} parent=1 // pred_region
      _
    $region9: #{perturbation_forward.1} parent=1 // pred_fallthru
      _
    // Predicated region
    $region10: #{perturbation_forward.1} parent=1 // pred_check
      _
    $region11: #{perturbation_forward.1} parent=1 // pred_check_branch
      %16 = sbr.rel (0) target = $region13
    $region12: #{perturbation_forward.1} parent=1 // pred_region
      _
    $region13: #{perturbation_forward.1} parent=1 // pred_fallthru
      _
    %v17 = vld [vmem:[%s0] sm:$0xff]
    %v18 = vld [vmem:[%s1] sm:$0xff]
    %v19 = vld [vmem:[%s2] sm:$0xff]
    %v20 = vadd.f32 %v17, %v18
    %21 = vst [vmem:[%s3] sm:$0xff] %v20
    %22 = vst [vmem:[%s3 + $0x8] sm:$0xff] %v19
    %v23 = vmul.f32 %v18, %v18
    %v24 = vmul.f32 %v19, %v19
    %v25 = vadd.f32 %v23, %v24
    %26 = vadd.xlane.f32.xlu0 %v25
    %v27 = vpop.xlane.xlu0 %26
    %v28 = vrot.slane %v27, 4
    %v29 = vadd.f32 %v27, %v28
    %v30 = vrot.slane %v29, 2
    %v31 = vadd.f32 %v29, %v30
    %v32 = vrot.slane %v31, 1
    %v33 = vadd.f32 %v31, %v32
    %s34 = vtos %v33
    %v35 = vstv %s34
    %v36 = vrsqrt.pop %v35
    %v37 = vmul.f32 %v35, %v36
    %vm38 = vcmp.eq.f32.partialorder %v35, inf
    %v39 = vsel %vm38, %v35, %v37
    %vm40 = vcmp.eq.f32.partialorder %v35, 0.0
    %v41 = vand.u32 %v35, 2147483648
    %v42 = vsel %vm40, %v41, %v39
    %s43 = vtos %v42
    %s44 = scalar_lea.smem [#allocation2], 0
    %45 = sst [smem:[%s44]] %s43
    // Predicated region
    $region14: #{perturbation_forward.1} parent=1 // pred_check
      _
    $region15: #{perturbation_forward.1} parent=1 // pred_check_branch
      %47 = sbr.rel (0) target = $region17
    $region16: #{perturbation_forward.1} parent=1 // pred_region
      _
    $region17: #{perturbation_forward.1} parent=1 // pred_fallthru
      _
    // Predicated region
    $region18: #{perturbation_forward.1} parent=1 // pred_check
      _
    $region19: #{perturbation_forward.1} parent=1 // pred_check_branch
      %49 = sbr.rel (0) target = $region21
    $region20: #{perturbation_forward.1} parent=1 // pred_region
      %s51 = ssub.s32 16, 16
      %52 = vsyncadd [#allocation3], %s51
      %55 = dma.smem_to_hbm [#allocation2], 16, %s4, [#allocation3]
    $region21: #{perturbation_forward.1} parent=1 // pred_fallthru
      _
    // Predicated region
    $region22: #{perturbation_forward.1} parent=1 // pred_check
      _
    $region23: #{perturbation_forward.1} parent=1 // pred_check_branch
      %57 = sbr.rel (0) target = $region25
    $region24: #{perturbation_forward.1} parent=1 // pred_region
      _
    $region25: #{perturbation_forward.1} parent=1 // pred_fallthru
      _
    // Predicated region
    $region26: #{perturbation_forward.1} parent=1 // pred_check
      _
    $region27: #{perturbation_forward.1} parent=1 // pred_check_branch
      %59 = sbr.rel (0) target = $region29
    $region28: #{perturbation_forward.1} parent=1 // pred_region
      %60 = dma.done [#allocation3], 16
    $region29: #{perturbation_forward.1} parent=1 // pred_fallthru
      _
    %61 = sfence
    %62 = vsyncpa [#allocation3], 1

</llo_original>
